<compile_context>
chip_gen: v6e
topology: v6e:2x2x1
jax: 0.10.0
libtpu: 0.0.40
codegen_flags: <defaults>
</compile_context>

<pallas_src>
import jax
import jax.numpy as jnp
from jax.experimental import pallas as pl
from jax.experimental.pallas import tpu as pltpu


def _round_up(x, m):
    return ((x + m - 1) // m) * m


# -----------------------------------------------------------------------------
# Kernels
# -----------------------------------------------------------------------------
def _unembed_kernel_fullk(res_ref, w_ref, out_ref):
    # Single K block: pure streaming matmul, no accumulator round-trip.
    out_ref[...] = jnp.dot(
        res_ref[...], w_ref[...], preferred_element_type=jnp.float32
    ).astype(out_ref.dtype)


def _unembed_kernel_ktiled(res_ref, w_ref, out_ref, acc_ref):
    # K is tiled: accumulate in an f32 VMEM scratch across the k grid axis.
    k = pl.program_id(2)

    @pl.when(k == 0)
    def _():
        acc_ref[...] = jnp.zeros_like(acc_ref)

    acc_ref[...] += jnp.dot(
        res_ref[...], w_ref[...], preferred_element_type=jnp.float32
    )

    @pl.when(k == pl.num_programs(2) - 1)
    def _():
        out_ref[...] = acc_ref[...].astype(out_ref.dtype)


# -----------------------------------------------------------------------------
# Tile planning (generation-aware)
# -----------------------------------------------------------------------------
_TN_MAX = 2048     # max vocab tile width
_TM_ASSUME = 256   # M-tile assumed while planning W_U tiles (M unknown at init)


def _vmem_budgets(vmem_budget_bytes=None, vmem_limit_bytes=None):
    try:
        info = pltpu.get_tpu_info()
        cap = int(getattr(info, "vmem_capacity_bytes", 0))
    except Exception:
        cap = 0
    if cap <= 0:
        cap = 64 * 1024 * 1024  # conservative fallback: v7x per-TensorCore VMEM
    limit = vmem_limit_bytes if vmem_limit_bytes is not None else int(cap * 0.875)
    budget = vmem_budget_bytes if vmem_budget_bytes is not None else int(cap * 0.68)
    budget = min(budget, limit)
    return budget, limit


def _plan_tiles(K, N, in_bytes, budget):
    """Precompute candidate (tk, tn) plans; returns (K_pad, N_pad, plans)."""
    K_pad = _round_up(K, 128)
    n128 = _round_up(N, 128)
    if n128 <= _TN_MAX:
        N_pad = n128
        tn_candidates = (n128,)
    else:
        N_pad = _round_up(N, _TN_MAX)
        tn_candidates = (2048, 1024, 512, 256, 128)   # all divide N_pad

    out_bytes = 4  # conservative (f32 output) for planning purposes

    def fullk_cost(tn):
        return (2 * (_TM_ASSUME * K_pad + K_pad * tn) * in_bytes
                + 2 * _TM_ASSUME * tn * out_bytes)

    def ktiled_cost(tk, tn):
        return (2 * (_TM_ASSUME * tk + tk * tn) * in_bytes
                + 2 * _TM_ASSUME * tn * out_bytes
                + _TM_ASSUME * tn * 4)

    plans = []
    # Full-K streaming plan with the widest tn that fits.
    for tn in tn_candidates:
        if fullk_cost(tn) <= budget:
            plans.append({"k_tiled": False, "tk": K_pad, "tn": tn})
            break
    # K-tiled plan (only meaningful if K can actually be split): widest tn,
    # then widest divisor tk that fits.
    if K_pad > 512:
        found = False
        for tn in tn_candidates:
            for tk in (2048, 1024, 512, 256, 128):
                if tk >= K_pad or K_pad % tk:
                    continue
                if ktiled_cost(tk, tn) <= budget:
                    plans.append({"k_tiled": True, "tk": tk, "tn": tn})
                    found = True
                    break
            if found:
                break
    if not plans:
        # Defensive fallback: smallest full-K tiles; rely on the compiler limit.
        plans.append({"k_tiled": False, "tk": K_pad, "tn": tn_candidates[-1]})
    return K_pad, N_pad, plans


def prepare_unembed(W_U, *, compute_dtype=jnp.bfloat16,
                    vmem_budget_bytes=None, vmem_limit_bytes=None):
    """One-time (weight-load / init) preparation.

    Casts W_U to the compute dtype and zero-pads it to the tile grid ONCE, so
    the per-call forward does no work on the big [d_model, d_vocab] operand.
    Returns (w_prepared, plan).
    """
    K, N = W_U.shape
    compute_dtype = jnp.dtype(compute_dtype)
    in_bytes = compute_dtype.itemsize
    budget, limit = _vmem_budgets(vmem_budget_bytes, vmem_limit_bytes)
    K_pad, N_pad, plans = _plan_tiles(K, N, in_bytes, budget)

    w = jnp.asarray(W_U).astype(compute_dtype)
    if (K_pad, N_pad) != (K, N):
        # Zero K-tail padding keeps the reduction exact without per-call work;
        # padded N columns are sliced off after the matmul.
        w = jnp.pad(w, ((0, K_pad - K), (0, N_pad - N)))

    plan = {
        "K": K, "N": N, "K_pad": K_pad, "N_pad": N_pad,
        "plans": tuple(plans),
        "compute_dtype": compute_dtype,
        "budget": budget, "limit": limit,
    }
    return w, plan


def _choose_tm(cfg, M, in_bytes, out_bytes, budget):
    """Pick the M tile.  Prefers one full-M block (gi == 1) -- for the K-tiled
    grid this keeps W_U streamed exactly once from HBM."""
    tk, tn, k_tiled = cfg["tk"], cfg["tn"], cfg["k_tiled"]

    def cost(tm):
        c = 2 * (tm * tk + tk * tn) * in_bytes + 2 * tm * tn * out_bytes
        if k_tiled:
            c += tm * tn * 4  # f32 accumulator scratch
        return c

    m16 = _round_up(M, 16)  # sublane packing for bf16 inputs
    if cost(m16) <= budget:
        return m16, m16
    for tm in (512, 256, 128):
        if cost(tm) <= budget:
            return tm, _round_up(M, tm)
    return 128, _round_up(M, 128)


# -----------------------------------------------------------------------------
# Forward
# -----------------------------------------------------------------------------
def unembed(residual, w_prepared, plan, *, out_dtype=None):
    """residual: [batch, pos, d_model] -> logits [batch, pos, d_vocab_out]."""
    batch, pos, d_model = residual.shape
    K, N = plan["K"], plan["N"]
    K_pad, N_pad = plan["K_pad"], plan["N_pad"]
    assert d_model == K, "residual d_model does not match prepared W_U"

    compute_dtype = plan["compute_dtype"]
    out_dtype = jnp.dtype(residual.dtype if out_dtype is None else out_dtype)
    in_bytes = compute_dtype.itemsize
    out_bytes = out_dtype.itemsize
    budget, limit = plan["budget"], plan["limit"]

    M = batch * pos

    # Pick the plan (full-K streaming vs. K-tiled) with the lower estimated
    # HBM traffic for this M.  The gi x W_U re-fetch of the K-tiled grid and
    # the gj x residual re-streaming are both accounted for.
    best = None
    for cfg in plan["plans"]:
        tm, M_pad = _choose_tm(cfg, M, in_bytes, out_bytes, budget)
        gi = M_pad // tm
        gj = N_pad // cfg["tn"]
        w_passes = gi if cfg["k_tiled"] else 1
        traffic = (gj * M_pad * K_pad * in_bytes
                   + w_passes * K_pad * N_pad * in_bytes
                   + M_pad * N_pad * out_bytes)
        cand = (traffic, cfg, tm, M_pad, gi, gj)
        if best is None or traffic < best[0]:
            best = cand
    traffic, cfg, tm, M_pad, gi, gj = best
    tk, tn, k_tiled = cfg["tk"], cfg["tn"], cfg["k_tiled"]
    gk = K_pad // tk

    # Per-call residual prep (small: M x K).
    res2d = residual.reshape(M, K).astype(compute_dtype)
    if (M_pad, K_pad) != (M, K):
        res2d = jnp.pad(res2d, ((0, M_pad - M), (0, K_pad - K)))

    cost = pl.CostEstimate(
        flops=2 * M_pad * K_pad * N_pad,
        transcendentals=0,
        bytes_accessed=int(traffic),
    )

    if not k_tiled:
        # Full-K streaming matmul.  Grid (j, i) with i innermost: the W_U
        # block index is constant over i, so each W_U tile leaves HBM once.
        grid_spec = pltpu.PrefetchScalarGridSpec(
            num_scalar_prefetch=0,
            grid=(gj, gi),
            in_specs=[
                pl.BlockSpec((tm, K_pad), lambda j, i: (i, 0)),
                pl.BlockSpec((K_pad, tn), lambda j, i: (0, j)),
            ],
            out_specs=pl.BlockSpec((tm, tn), lambda j, i: (i, j)),
        )
        kernel = _unembed_kernel_fullk
        # Only j (vocab) is "parallel": the v7x 2-TC megacore split lands on
        # the vocab axis so each TensorCore reads half of W_U, not all of it.
        dim_sem = ("parallel", "arbitrary")
        scratch = ()
    else:
        grid_spec = pltpu.PrefetchScalarGridSpec(
            num_scalar_prefetch=0,
            grid=(gj, gi, gk),
            in_specs=[
                pl.BlockSpec((tm, tk), lambda j, i, k: (i, k)),
                pl.BlockSpec((tk, tn), lambda j, i, k: (k, j)),
            ],
            out_specs=pl.BlockSpec((tm, tn), lambda j, i, k: (i, j)),
            scratch_shapes=[pltpu.VMEM((tm, tn), jnp.float32)],
        )
        kernel = _unembed_kernel_ktiled
        dim_sem = ("parallel", "arbitrary", "arbitrary")

    out2d = pl.pallas_call(
        kernel,
        out_shape=jax.ShapeDtypeStruct((M_pad, N_pad), out_dtype),
        grid_spec=grid_spec,
        compiler_params=pltpu.CompilerParams(
            dimension_semantics=dim_sem,
            vmem_limit_bytes=limit,
        ),
        cost_estimate=cost,
    )(res2d, w_prepared)

    return out2d[:M, :N].reshape(batch, pos, N)


# -----------------------------------------------------------------------------
# Self-test
# -----------------------------------------------------------------------------
if __name__ == "__main__":
    key = jax.random.PRNGKey(0)
    k_res, k_w, k_res2, k_w2 = jax.random.split(key, 4)

    # Test 1: small config; d_model / d_vocab_out deliberately NOT multiples
    # of 128 (real vocabs like 50257 aren't) -> exercises padding + the
    # full-K streaming kernel.
    batch, pos, d_model, d_vocab_out = 2, 8, 96, 300
    residual = jax.random.normal(k_res, (batch, pos, d_model), dtype=jnp.float32)
    W_U = jax.random.normal(k_w, (d_model, d_vocab_out), dtype=jnp.float32) * 0.02

    # One-time weight preparation (cast + pad), hoisted out of the forward path.
    w_prep, plan = prepare_unembed(W_U)
    out = jax.block_until_ready(unembed(residual, w_prep, plan))
    assert out.shape == (batch, pos, d_vocab_out)

    # Reference 1: same bf16-cast operands, f32 accumulation (tight kernel check).
    res_bf = residual.astype(jnp.bfloat16).astype(jnp.float32)
    w_bf = W_U.astype(jnp.bfloat16).astype(jnp.float32)
    ref_bf = jnp.einsum("bpd,dv->bpv", res_bf, w_bf,
                        precision=jax.lax.Precision.HIGHEST)
    assert jnp.allclose(out, ref_bf, atol=1e-4, rtol=1e-4)

    # Reference 2: full-f32 reference (loose check covering the bf16 cast).
    ref_f32 = jnp.einsum("bpd,dv->bpv", residual, W_U,
                         precision=jax.lax.Precision.HIGHEST)
    assert jnp.allclose(out, ref_f32, atol=1e-2, rtol=1e-2)

    # Test 2: force the K-tiled accumulator path with a tiny VMEM budget.
    batch2, pos2, d_model2, d_vocab2 = 2, 8, 1024, 640
    residual2 = jax.random.normal(k_res2, (batch2, pos2, d_model2), dtype=jnp.float32)
    W_U2 = jax.random.normal(k_w2, (d_model2, d_vocab2), dtype=jnp.float32) * 0.02
    w_prep2, plan2 = prepare_unembed(W_U2, vmem_budget_bytes=3 * 1024 * 1024)
    assert any(c["k_tiled"] for c in plan2["plans"])
    out2 = jax.block_until_ready(unembed(residual2, w_prep2, plan2))
    assert out2.shape == (batch2, pos2, d_vocab2)
    ref2 = jnp.einsum(
        "bpd,dv->bpv",
        residual2.astype(jnp.bfloat16).astype(jnp.float32),
        W_U2.astype(jnp.bfloat16).astype(jnp.float32),
        precision=jax.lax.Precision.HIGHEST)
    assert jnp.allclose(out2, ref2, atol=3e-3, rtol=3e-3)

    print("KERNEL_OK")
</pallas_src>

<mosaic_0001>
module attributes {stable_mosaic.version = 11 : i64} {
  func.func @_unembed_kernel_fullk(%arg0: i32, %arg1: i32, %arg2: memref<16x128xbf16, #tpu.memory_space<vmem>>, %arg3: memref<128x384xbf16, #tpu.memory_space<vmem>>, %arg4: memref<16x384xf32, #tpu.memory_space<vmem>>) attributes {dimension_semantics = [#tpu.dimension_semantics<parallel>, #tpu.dimension_semantics<arbitrary>], iteration_bounds = array<i64: 1, 1>, scalar_prefetch = 0 : i64, scratch_operands = 0 : i64, tpu.core_type = #tpu.core_type<tc>, window_params = [{transform_indices = @transform_0, window_bounds = array<i64: 16, 128>}, {transform_indices = @transform_1, window_bounds = array<i64: 128, 384>}, {transform_indices = @transform_2, window_bounds = array<i64: 16, 384>}]} {
    %c0 = arith.constant 0 : index
    %c0_0 = arith.constant 0 : index
    %0 = vector.load %arg2[%c0, %c0_0] : memref<16x128xbf16, #tpu.memory_space<vmem>>, vector<16x128xbf16>
    %c0_1 = arith.constant 0 : index
    %c0_2 = arith.constant 0 : index
    %1 = vector.load %arg3[%c0_1, %c0_2] : memref<128x384xbf16, #tpu.memory_space<vmem>>, vector<128x384xbf16>
    %cst = arith.constant dense<0.000000e+00> : vector<16x384xf32>
    %2 = tpu.matmul %0, %1, %cst {dimension_numbers = #tpu.dot_dimension_numbers<[1], [0], [0], [1], [0, 0, 1, 1], [], []>} : vector<16x128xbf16>, vector<128x384xbf16>, vector<16x384xf32> -> vector<16x384xf32>
    %c0_3 = arith.constant 0 : index
    %c0_4 = arith.constant 0 : index
    %3 = vector.load %arg4[%c0_3, %c0_4] : memref<16x384xf32, #tpu.memory_space<vmem>>, vector<16x384xf32>
    tpu.vector_store %arg4[%c0_3, %c0_4], %2 {strides = array<i32>} : memref<16x384xf32, #tpu.memory_space<vmem>>, vector<16x384xf32>,
    return
  }
  func.func @transform_0(%arg0: i32, %arg1: i32) -> (i32, i32) {
    %c0_i32 = arith.constant 0 : i32
    %c0_i32_0 = arith.constant 0 : i32
    return %arg1, %c0_i32 : i32, i32
  }
  func.func @transform_1(%arg0: i32, %arg1: i32) -> (i32, i32) {
    %c0_i32 = arith.constant 0 : i32
    %c0_i32_0 = arith.constant 0 : i32
    return %c0_i32, %arg0 : i32, i32
  }
  func.func @transform_2(%arg0: i32, %arg1: i32) -> (i32, i32) {
    %c0_i32 = arith.constant 0 : i32
    return %arg1, %arg0 : i32, i32
  }
}

</mosaic_0001>

<llo_original>
// kernel: tpu_custom_call.1
$region0: #{tpu_custom_call.1}
  #allocation0 [shape = 'u32[]', space=smem, size = 0x4, offset = 0x4, fixed_abs, tag = 'smem constant byte address 0x4 - core index']
  #allocation1 [shape = 'u32[144,128]{1,0:T(1,128)}', space=vmem, size = 0x12000, scoped, tag = 'internal scratch']
  %s0 = inlined_call_operand.hbm [shape: bf16[16,128], index: 0, kind: input, shape index: {}]
  %s1 = inlined_call_operand.hbm [shape: bf16[128,384], index: 1, kind: input, shape index: {}]
  %s2 = inlined_call_operand.hbm [shape: f32[16,384], index: 2, kind: output, shape index: {}]
  %s3 = sld [smem:[#allocation0]]
  $region26: #{tpu_custom_call.1} parent=0
    _
  %s5 = ssub.s32 1, %s3
  %s6 = scalar_select 0, %s5, %s3
  $region1: #{tpu_custom_call.1} parent=0
    #allocation2 [shape = 'u8[4096]{0}', space=vmem, size = 0x1000, scoped, tag = 'input window, operand 0, single buffered']
    #allocation3 [shape = 's32[1]{0}', space=sflag, size = 0x4, scoped, tag = 'scoped memory for tpu_custom_call.1']
    #allocation4 [shape = 's32[1]{0}', space=sflag, size = 0x4, scoped, tag = 'scoped memory for tpu_custom_call.1']
    #allocation5 [shape = 'u8[98304]{0}', space=vmem, size = 0x18000, scoped, tag = 'input window, operand 1, single buffered']
    #allocation6 [shape = 's32[1]{0}', space=sflag, size = 0x4, scoped, tag = 'scoped memory for tpu_custom_call.1']
    #allocation7 [shape = 'u8[24576]{0}', space=vmem, size = 0x6000, scoped, tag = 'output window, operand 0, single buffered']
    %7 = vsyncpa [#allocation3], 0
    %8 = vsyncpa [#allocation6], 0
    %9 = vsyncpa [#allocation4], 0
    // Predicated region
    $region2: #{tpu_custom_call.1} parent=1 // pred_check
      _
    $region3: #{tpu_custom_call.1} parent=1 // pred_check_branch
      %11 = sbr.rel (0) target = $region5
    $region4: #{tpu_custom_call.1} parent=1 // pred_region
      %s13 = ssub.s32 128, 128
      %14 = vsyncadd [#allocation3], %s13
      %s15 = sshll.u32 [#allocation2], 4
      %s16 = int_to_ptr.vmem [resolvable:$true] %s15
      %21 = dma.hbm_to_vmem [thread:$0]  %s0, 128, %s16, [#allocation3], 64, 64, 4
    $region5: #{tpu_custom_call.1} parent=1 // pred_fallthru
      _
    // Predicated region
    $region6: #{tpu_custom_call.1} parent=1 // pred_check
      _
    $region7: #{tpu_custom_call.1} parent=1 // pred_check_branch
      %23 = sbr.rel (0) target = $region9
    $region8: #{tpu_custom_call.1} parent=1 // pred_region
      %s25 = ssub.s32 3072, 3072
      %26 = vsyncadd [#allocation6], %s25
      %s27 = sshll.u32 [#allocation5], 4
      %s28 = int_to_ptr.vmem [resolvable:$true] %s27
      %33 = dma.hbm_to_vmem [thread:$0]  %s1, 3072, %s28, [#allocation6], 192, 192, 12
    $region9: #{tpu_custom_call.1} parent=1 // pred_fallthru
      _
    // Predicated region
    $region10: #{tpu_custom_call.1} parent=1 // pred_check
      _
    $region11: #{tpu_custom_call.1} parent=1 // pred_check_branch
      %35 = sbr.rel (0) target = $region13
    $region12: #{tpu_custom_call.1} parent=1 // pred_region
      %36 = dma.done [#allocation3], 128
    $region13: #{tpu_custom_call.1} parent=1 // pred_fallthru
      _
    // Predicated region
    $region14: #{tpu_custom_call.1} parent=1 // pred_check
      _
    $region15: #{tpu_custom_call.1} parent=1 // pred_check_branch
      %38 = sbr.rel (0) target = $region17
    $region16: #{tpu_custom_call.1} parent=1 // pred_region
      %39 = dma.done [#allocation6], 3072
    $region17: #{tpu_custom_call.1} parent=1 // pred_fallthru
      _
    %v41 = vld [vmem:[#allocation2] sm:$0xf]
    %v42 = vld [vmem:[#allocation2 + $0x4] sm:$0xf]
    %v43 = vld [vmem:[#allocation5] sm:$0xff]
    %v44 = vld [vmem:[#allocation5 + $0x8] sm:$0xf]
    %v45 = vld [vmem:[#allocation5 + $0xc] sm:$0xff]
    %v46 = vld [vmem:[#allocation5 + $0x14] sm:$0xf]
    %v47 = vld [vmem:[#allocation5 + $0x18] sm:$0xff]
    %v48 = vld [vmem:[#allocation5 + $0x20] sm:$0xf]
    %v49 = vld [vmem:[#allocation5 + $0x24] sm:$0xff]
    %v50 = vld [vmem:[#allocation5 + $0x2c] sm:$0xf]
    %v51 = vld [vmem:[#allocation5 + $0x30] sm:$0xff]
    %v52 = vld [vmem:[#allocation5 + $0x38] sm:$0xf]
    %v53 = vld [vmem:[#allocation5 + $0x3c] sm:$0xff]
    %v54 = vld [vmem:[#allocation5 + $0x44] sm:$0xf]
    %v55 = vld [vmem:[#allocation5 + $0x48] sm:$0xff]
    %v56 = vld [vmem:[#allocation5 + $0x50] sm:$0xf]
    %v57 = vld [vmem:[#allocation5 + $0x54] sm:$0xff]
    %v58 = vld [vmem:[#allocation5 + $0x5c] sm:$0xf]
    %v59 = vld [vmem:[#allocation5 + $0x60] sm:$0xff]
    %v60 = vld [vmem:[#allocation5 + $0x68] sm:$0xf]
    %v61 = vld [vmem:[#allocation5 + $0x6c] sm:$0xff]
    %v62 = vld [vmem:[#allocation5 + $0x74] sm:$0xf]
    %v63 = vld [vmem:[#allocation5 + $0x78] sm:$0xff]
    %v64 = vld [vmem:[#allocation5 + $0x80] sm:$0xf]
    %v65 = vld [vmem:[#allocation5 + $0x84] sm:$0xff]
    %v66 = vld [vmem:[#allocation5 + $0x8c] sm:$0xf]
    %v67 = vld [vmem:[#allocation5 + $0x90] sm:$0xff]
    %v68 = vld [vmem:[#allocation5 + $0x98] sm:$0xf]
    %v69 = vld [vmem:[#allocation5 + $0x9c] sm:$0xff]
    %v70 = vld [vmem:[#allocation5 + $0xa4] sm:$0xf]
    %v71 = vld [vmem:[#allocation5 + $0xa8] sm:$0xff]
    %v72 = vld [vmem:[#allocation5 + $0xb0] sm:$0xf]
    %v73 = vld [vmem:[#allocation5 + $0xb4] sm:$0xff]
    %v74 = vld [vmem:[#allocation5 + $0xbc] sm:$0xf]
    %v77 = vunpack.c.l.b16 %v41
    %v78 = vunpack.c.l.b16 %v42
    %v79 = vpack.c.b16 %v78, %v77
    %v113 = vunpack.c.l.b16 %v43
    %v114 = vunpack.c.h.b16 %v43
    %v115 = vunpack.c.l.b16 %v44
    %v116 = vunpack.c.l.b16 %v45
    %v117 = vunpack.c.h.b16 %v45
    %v118 = vunpack.c.l.b16 %v46
    %v119 = vunpack.c.l.b16 %v47
    %v120 = vunpack.c.h.b16 %v47
    %v121 = vunpack.c.l.b16 %v48
    %v122 = vunpack.c.l.b16 %v49
    %v123 = vunpack.c.h.b16 %v49
    %v124 = vunpack.c.l.b16 %v50
    %v125 = vunpack.c.l.b16 %v51
    %v126 = vunpack.c.h.b16 %v51
    %v127 = vunpack.c.l.b16 %v52
    %v128 = vunpack.c.l.b16 %v53
    %v129 = vunpack.c.h.b16 %v53
    %v130 = vunpack.c.l.b16 %v54
    %v131 = vunpack.c.l.b16 %v55
    %v132 = vunpack.c.h.b16 %v55
    %v133 = vunpack.c.l.b16 %v56
    %v134 = vunpack.c.l.b16 %v57
    %v135 = vunpack.c.h.b16 %v57
    %v136 = vunpack.c.l.b16 %v58
    %v137 = vunpack.c.l.b16 %v59
    %v138 = vunpack.c.h.b16 %v59
    %v139 = vunpack.c.l.b16 %v60
    %v140 = vunpack.c.l.b16 %v61
    %v141 = vunpack.c.h.b16 %v61
    %v142 = vunpack.c.l.b16 %v62
    %v143 = vunpack.c.l.b16 %v63
    %v144 = vunpack.c.h.b16 %v63
    %v145 = vunpack.c.l.b16 %v64
    %v146 = vunpack.c.l.b16 %v65
    %v147 = vunpack.c.h.b16 %v65
    %v148 = vunpack.c.l.b16 %v66
    %v149 = vunpack.c.l.b16 %v67
    %v150 = vunpack.c.h.b16 %v67
    %v151 = vunpack.c.l.b16 %v68
    %v152 = vunpack.c.l.b16 %v69
    %v153 = vunpack.c.h.b16 %v69
    %v154 = vunpack.c.l.b16 %v70
    %v155 = vunpack.c.l.b16 %v71
    %v156 = vunpack.c.h.b16 %v71
    %v157 = vunpack.c.l.b16 %v72
    %v158 = vunpack.c.l.b16 %v73
    %v159 = vunpack.c.h.b16 %v73
    %v160 = vunpack.c.l.b16 %v74
    %v161 = vpack.c.b16 %v116, %v113
    %v162 = vpack.c.b16 %v117, %v114
    %v163 = vpack.c.b16 %v118, %v115
    %v164 = vpack.c.b16 %v122, %v119
    %v165 = vpack.c.b16 %v123, %v120
    %v166 = vpack.c.b16 %v124, %v121
    %v167 = vpack.c.b16 %v128, %v125
    %v168 = vpack.c.b16 %v129, %v126
    %v169 = vpack.c.b16 %v130, %v127
    %v170 = vpack.c.b16 %v134, %v131
    %v171 = vpack.c.b16 %v135, %v132
    %v172 = vpack.c.b16 %v136, %v133
    %v173 = vpack.c.b16 %v140, %v137
    %v174 = vpack.c.b16 %v141, %v138
    %v175 = vpack.c.b16 %v142, %v139
    %v176 = vpack.c.b16 %v146, %v143
    %v177 = vpack.c.b16 %v147, %v144
    %v178 = vpack.c.b16 %v148, %v145
    %v179 = vpack.c.b16 %v152, %v149
    %v180 = vpack.c.b16 %v153, %v150
    %v181 = vpack.c.b16 %v154, %v151
    %v182 = vpack.c.b16 %v158, %v155
    %v183 = vpack.c.b16 %v159, %v156
    %v184 = vpack.c.b16 %v160, %v157
    %209 = vmatprep.subr.bf16.mxu0 %v183
    %210 = vmatpush1.bf16.msra.mxu0 %v182
    %211 = vmatprep.subr.bf16.mxu0 %v180
    %212 = vmatpush1.bf16.msra.mxu0 %v179
    %213 = vmatprep.subr.bf16.mxu0 %v177
    %214 = vmatpush1.bf16.msra.mxu0 %v176
    %215 = vmatprep.subr.bf16.mxu0 %v174
    %216 = vmatpush1.bf16.msra.mxu0 %v173
    %217 = vmatprep.subr.bf16.mxu0 %v171
    %218 = vmatpush1.bf16.msra.mxu0 %v170
    %219 = vmatprep.subr.bf16.mxu0 %v168
    %220 = vmatpush1.bf16.msra.mxu0 %v167
    %221 = vmatprep.subr.bf16.mxu0 %v165
    %222 = vmatpush1.bf16.msra.mxu0 %v164
    %223 = vmatprep.subr.bf16.mxu0 %v162
    %224 = vmatpush1.bf16.msra.mxu0 %v161
    %225 = vmatprep.subr.bf16.mxu0 0
    %226 = vmatpush2.bf16.msra.mxu0 0
    %227 = vmatprep.subr.bf16.mxu0 0
    %228 = vmatpush2.bf16.msra.mxu0 0
    %229 = vmatprep.subr.bf16.mxu0 0
    %230 = vmatpush2.bf16.msra.mxu0 0
    %231 = vmatprep.subr.bf16.mxu0 0
    %232 = vmatpush2.bf16.msra.mxu0 0
    %233 = vmatprep.subr.bf16.mxu0 0
    %234 = vmatpush2.bf16.msra.mxu0 0
    %235 = vmatprep.subr.bf16.mxu0 0
    %236 = vmatpush2.bf16.msra.mxu0 0
    %237 = vmatprep.subr.bf16.mxu0 0
    %238 = vmatpush2.bf16.msra.mxu0 0
    %239 = vmatprep.subr.bf16.mxu0 0
    %240 = vmatpush2.bf16.msra.mxu0 0
    %241 = vmatprep.mubr.bf16.mxu0 0
    %242 = vmatmul.mubr.bf16.gmra.mxu0 %v79
    %v243 = vpop.f32.mrf.mxu0
    %v244 = vadd.f32 0.0, %v243
    %v245 = vpop.f32.mrf.mxu0
    %v246 = vadd.f32 0.0, %v245
    %v247 = vpop.f32.mrf.mxu0
    %v248 = vadd.f32 0.0, %v247
    %v249 = vpop.f32.mrf.mxu0
    %v250 = vadd.f32 0.0, %v249
    %251 = vdwg.mxu0
    %252 = vmatprep.subr.bf16.mxu0 0
    %253 = vmatpush1.bf16.msra.mxu0 %v184
    %254 = vmatprep.subr.bf16.mxu0 0
    %255 = vmatpush1.bf16.msra.mxu0 %v181
    %256 = vmatprep.subr.bf16.mxu0 0
    %257 = vmatpush1.bf16.msra.mxu0 %v178
    %258 = vmatprep.subr.bf16.mxu0 0
    %259 = vmatpush1.bf16.msra.mxu0 %v175
    %260 = vmatprep.subr.bf16.mxu0 0
    %261 = vmatpush1.bf16.msra.mxu0 %v172
    %262 = vmatprep.subr.bf16.mxu0 0
    %263 = vmatpush1.bf16.msra.mxu0 %v169
    %264 = vmatprep.subr.bf16.mxu0 0
    %265 = vmatpush1.bf16.msra.mxu0 %v166
    %266 = vmatprep.subr.bf16.mxu0 0
    %267 = vmatpush1.bf16.msra.mxu0 %v163
    %268 = vmatprep.subr.bf16.mxu0 0
    %269 = vmatpush2.bf16.msra.mxu0 0
    %270 = vmatprep.subr.bf16.mxu0 0
    %271 = vmatpush2.bf16.msra.mxu0 0
    %272 = vmatprep.subr.bf16.mxu0 0
    %273 = vmatpush2.bf16.msra.mxu0 0
    %274 = vmatprep.subr.bf16.mxu0 0
    %275 = vmatpush2.bf16.msra.mxu0 0
    %276 = vmatprep.subr.bf16.mxu0 0
    %277 = vmatpush2.bf16.msra.mxu0 0
    %278 = vmatprep.subr.bf16.mxu0 0
    %279 = vmatpush2.bf16.msra.mxu0 0
    %280 = vmatprep.subr.bf16.mxu0 0
    %281 = vmatpush2.bf16.msra.mxu0 0
    %282 = vmatprep.subr.bf16.mxu0 0
    %283 = vmatpush2.bf16.msra.mxu0 0
    %284 = vmatprep.mubr.bf16.mxu0 0
    %285 = vmatmul.mubr.bf16.gmra.mxu0 %v79
    %v286 = vpop.f32.mrf.mxu0
    %v287 = vadd.f32 0.0, %v286
    %v288 = vpop.f32.mrf.mxu0
    %v289 = vpop.f32.mrf.mxu0
    %v290 = vadd.f32 0.0, %v289
    %v291 = vpop.f32.mrf.mxu0
    %292 = vdwg.mxu0
    %293 = vst [vmem:[#allocation7] sm:$0xff] %v244
    %294 = vst [vmem:[#allocation7 + $0x8] sm:$0xff] %v246
    %295 = vst [vmem:[#allocation7 + $0x10] sm:$0xff] %v287
    %296 = vst [vmem:[#allocation7 + $0x18] sm:$0xff] %v248
    %297 = vst [vmem:[#allocation7 + $0x20] sm:$0xff] %v250
    %298 = vst [vmem:[#allocation7 + $0x28] sm:$0xff] %v290
    // Predicated region
    $region18: #{tpu_custom_call.1} parent=1 // pred_check
      _
    $region19: #{tpu_custom_call.1} parent=1 // pred_check_branch
      %300 = sbr.rel (0) target = $region21
    $region20: #{tpu_custom_call.1} parent=1 // pred_region
      %s302 = ssub.s32 768, 768
      %303 = vsyncadd [#allocation4], %s302
      %s304 = sshll.u32 [#allocation7], 4
      %s305 = int_to_ptr.vmem [resolvable:$true] %s304
      %310 = dma.vmem_to_hbm [thread:$0]  %s305, 768, %s2, [#allocation4], 384, 384, 24
    $region21: #{tpu_custom_call.1} parent=1 // pred_fallthru
      _
    // Predicated region
    $region22: #{tpu_custom_call.1} parent=1 // pred_check
      _
    $region23: #{tpu_custom_call.1} parent=1 // pred_check_branch
      %312 = sbr.rel (0) target = $region25
    $region24: #{tpu_custom_call.1} parent=1 // pred_region
      %313 = dma.done [#allocation4], 768
    $region25: #{tpu_custom_call.1} parent=1 // pred_fallthru
      _
    %314 = vsyncpa [#allocation3], 1
    %315 = vsyncpa [#allocation6], 1
    %316 = vsyncpa [#allocation4], 1

</llo_original>
